<compile_context>
chip_gen: v5e
topology: v5e:2x2
jax: 0.10.0
libtpu: 0.0.40
codegen_flags: <defaults>
</compile_context>

<pallas_src>
import math
from functools import partial

import jax
import jax.numpy as jnp
from jax import lax
from jax.experimental import pallas as pl
from jax.experimental.pallas import tpu as pltpu


# ----------------------------- small utilities ---------------------------------

def _vmem_limit_bytes():
    """Generation-aware scoped-VMEM request: ~3/4 of physical, capped at 100 MiB."""
    try:
        cap = pltpu.get_tpu_info().vmem_capacity_bytes
        return int(min(cap * 3 // 4, 100 * 1024 * 1024))
    except Exception:
        return 32 * 1024 * 1024


_VMEM_LIMIT = _vmem_limit_bytes()


def _pick_row_tile(m, target=256):
    """Largest multiple-of-8 divisor of m up to `target`; fall back to full extent."""
    best = None
    t = 8
    while t <= min(m, target):
        if m % t == 0:
            best = t
        t += 8
    return best if best is not None else m


def _pick_col_tile(n, target=1024):
    """Lane-dense (128-multiple) tile of a column axis; full extent if not possible."""
    if n % 128 != 0:
        return n
    best = 128
    t = 128
    while t <= min(n, target):
        if n % t == 0:
            best = t
        t += 128
    return best


_BUFFERED_ONE_OK = None


def _probe_buffered_one():
    """Return True iff this JAX build accepts single-buffered BlockSpecs (pl.Buffered(1))."""
    try:
        def _k(x_ref, o_ref):
            o_ref[...] = x_ref[...] + 1.0

        x = jnp.zeros((8, 128), jnp.float32)
        out = pl.pallas_call(
            _k,
            out_shape=jax.ShapeDtypeStruct((8, 128), jnp.float32),
            grid=(2,),
            in_specs=[pl.BlockSpec((8, 128), lambda i: (0, 0),
                                   pipeline_mode=pl.Buffered(1))],
            out_specs=pl.BlockSpec((8, 128), lambda i: (0, 0)),
        )(x)
        jax.block_until_ready(out)
        return True
    except Exception:
        return False


def _use_buffered_one():
    global _BUFFERED_ONE_OK
    if _BUFFERED_ONE_OK is None:
        _BUFFERED_ONE_OK = _probe_buffered_one()
    return _BUFFERED_ONE_OK


def _const_spec(block_shape, index_map):
    """BlockSpec for grid-invariant (weight) blocks; single-buffered when supported."""
    if _use_buffered_one():
        return pl.BlockSpec(block_shape, index_map, pipeline_mode=pl.Buffered(1))
    return pl.BlockSpec(block_shape, index_map)


# ---------------- kernel 1: RMSNorm + per-head QKV projection + RoPE -----------
# grid = (B, S//ts, nh); head axis innermost ("arbitrary") so the normalized activation is
# computed once per row tile into VMEM scratch and reused for every head's column block.

def _norm_qkv_rope_kernel(x_ref, nw_ref, w_ref, cos_ref, sin_ref,
                          q_ref, k_ref, v_ref, h_scr):
    hd = cos_ref.shape[-1]
    half = hd // 2

    @pl.when(pl.program_id(2) == 0)
    def _():
        x = x_ref[0].astype(jnp.float32)                                 # (ts, H)
        var = jnp.mean(x * x, axis=-1, keepdims=True)
        h_scr[...] = ((x * lax.rsqrt(var + 1e-6)) * nw_ref[...]).astype(jnp.bfloat16)

    # (ts, H) @ (H, 3*hd) -> (ts, 3*hd) for this head only (column-tiled QKV weight).
    qkv = jnp.dot(h_scr[...], w_ref[0], preferred_element_type=jnp.float32)
    qh, kh, vh = qkv[:, :hd], qkv[:, hd:2 * hd], qkv[:, 2 * hd:]
    cos, sin = cos_ref[...], sin_ref[...]                                # (ts, hd) f32

    def rope(u):
        # rotate-half via slice/negate/concat (no matmul, no cross-head wrap).
        rot = jnp.concatenate([-u[:, half:], u[:, :half]], axis=-1)
        return u * cos + rot * sin

    q_ref[0, 0] = rope(qh).astype(jnp.bfloat16)
    k_ref[0, 0] = rope(kh).astype(jnp.bfloat16)
    v_ref[0, 0] = vh.astype(jnp.bfloat16)


@jax.jit
def fused_norm_qkv_rope(x, norm_w, wqkv_heads, cos, sin):
    B, S, H = x.shape
    nh, _, three_hd = wqkv_heads.shape
    hd = three_hd // 3
    ts = _pick_row_tile(S)
    out_sds = jax.ShapeDtypeStruct((B, nh, S, hd), jnp.bfloat16)
    return pl.pallas_call(
        _norm_qkv_rope_kernel,
        out_shape=(out_sds, out_sds, out_sds),
        grid=(B, S // ts, nh),
        in_specs=[
            pl.BlockSpec((1, ts, H), lambda b, i, h: (b, i, 0)),
            _const_spec((1, H), lambda b, i, h: (0, 0)),
            pl.BlockSpec((1, H, three_hd), lambda b, i, h: (h, 0, 0)),
            pl.BlockSpec((ts, hd), lambda b, i, h: (i, 0)),
            pl.BlockSpec((ts, hd), lambda b, i, h: (i, 0)),
        ],
        out_specs=(
            pl.BlockSpec((1, 1, ts, hd), lambda b, i, h: (b, h, i, 0)),
            pl.BlockSpec((1, 1, ts, hd), lambda b, i, h: (b, h, i, 0)),
            pl.BlockSpec((1, 1, ts, hd), lambda b, i, h: (b, h, i, 0)),
        ),
        scratch_shapes=[pltpu.VMEM((ts, H), jnp.bfloat16)],
        compiler_params=pltpu.CompilerParams(
            dimension_semantics=("parallel", "parallel", "arbitrary"),
            vmem_limit_bytes=_VMEM_LIMIT),
    )(x, norm_w.reshape(1, H), wqkv_heads, cos, sin)


# --------------- kernel 2: attention (all heads, batched) + wo + residual -------
# grid = (B, S//tq) both parallel.  Heads ride the batch dimension of dot_general; wo is applied
# as a per-head-batched matmul summed over the head axis (equivalent to concat(heads) @ wo),
# which avoids an in-kernel minor-dim reshape.
# TODO(synk): at long T, tile the KV axis flash-style (online softmax with m/l/acc scratch).

def _attn_wo_kernel(x_ref, q_ref, k_ref, v_ref, wo_ref, o_ref, *, seq_new):
    tq = q_ref.shape[2]
    hd = q_ref.shape[3]
    T = k_ref.shape[2]
    scale = 1.0 / math.sqrt(hd)
    offset = T - seq_new                                   # past (+ trainable) prefix length
    qpos = lax.broadcasted_iota(jnp.int32, (tq, T), 0) + offset + pl.program_id(1) * tq
    kpos = lax.broadcasted_iota(jnp.int32, (tq, T), 1)
    mask = kpos <= qpos                                    # causal; full prefix visible

    q = q_ref[0]                                           # (nh, tq, hd) bf16 (RoPE'd)
    k = k_ref[0]                                           # (nh, T,  hd) bf16
    v = v_ref[0]                                           # (nh, T,  hd) bf16

    s = jnp.einsum('hqd,hkd->hqk', q, k,
                   preferred_element_type=jnp.float32) * scale          # (nh, tq, T)
    s = jnp.where(mask[None, :, :], s, -1e30)
    m = jnp.max(s, axis=-1, keepdims=True)
    p = jnp.exp(s - m)
    l = jnp.sum(p, axis=-1, keepdims=True)
    o = jnp.einsum('hqk,hkd->hqd', p.astype(jnp.bfloat16), v,
                   preferred_element_type=jnp.float32)                  # (nh, tq, hd)
    o = o * pl.reciprocal(l, approx=True)                               # single normalize (EUP)
    proj = jnp.einsum('hqd,hde->hqe', o.astype(jnp.bfloat16), wo_ref[...],
                      preferred_element_type=jnp.float32)               # (nh, tq, H)
    out = x_ref[0].astype(jnp.float32) + jnp.sum(proj, axis=0)          # fused residual add
    o_ref[0] = out.astype(jnp.bfloat16)


@jax.jit
def fused_attention_wo(x, q, k, v, wo_heads):
    B, S, H = x.shape
    nh, hd = wo_heads.shape[0], wo_heads.shape[1]
    T = k.shape[2]
    tq = _pick_row_tile(S, target=128)
    kern = partial(_attn_wo_kernel, seq_new=S)
    return pl.pallas_call(
        kern,
        out_shape=jax.ShapeDtypeStruct((B, S, H), jnp.bfloat16),
        grid=(B, S // tq),
        in_specs=[
            pl.BlockSpec((1, tq, H), lambda b, i: (b, i, 0)),
            pl.BlockSpec((1, nh, tq, hd), lambda b, i: (b, 0, i, 0)),
            pl.BlockSpec((1, nh, T, hd), lambda b, i: (b, 0, 0, 0)),
            pl.BlockSpec((1, nh, T, hd), lambda b, i: (b, 0, 0, 0)),
            _const_spec((nh, hd, H), lambda b, i: (0, 0, 0)),
        ],
        out_specs=pl.BlockSpec((1, tq, H), lambda b, i: (b, i, 0)),
        compiler_params=pltpu.CompilerParams(
            dimension_semantics=("parallel", "parallel"),
            vmem_limit_bytes=_VMEM_LIMIT),
    )(x, q, k, v, wo_heads)


# ------------------ kernel 3: RMSNorm + SwiGLU MLP + residual -------------------
# grid = (M//tm, F//tf); F axis innermost ("arbitrary"): wg/wu column blocks, wd row blocks,
# partial down-projections accumulated into an f32 VMEM accumulator, norm hoisted to scratch.

def _norm_mlp_kernel(x_ref, nw_ref, wg_ref, wu_ref, wd_ref, o_ref, h_scr, acc_scr):
    j = pl.program_id(1)

    @pl.when(j == 0)
    def _():
        x = x_ref[...].astype(jnp.float32)
        var = jnp.mean(x * x, axis=-1, keepdims=True)
        h_scr[...] = ((x * lax.rsqrt(var + 1e-6)) * nw_ref[...]).astype(jnp.bfloat16)
        acc_scr[...] = x                                    # residual accumulates in f32

    h = h_scr[...]
    g = jnp.dot(h, wg_ref[...], preferred_element_type=jnp.float32)
    u = jnp.dot(h, wu_ref[...], preferred_element_type=jnp.float32)
    act = (jax.nn.silu(g) * u).astype(jnp.bfloat16)
    acc_scr[...] += jnp.dot(act, wd_ref[...], preferred_element_type=jnp.float32)

    @pl.when(j == pl.num_programs(1) - 1)
    def _():
        o_ref[...] = acc_scr[...].astype(jnp.bfloat16)


@jax.jit
def fused_norm_mlp(x, norm_w, wg, wu, wd):
    M, H = x.shape
    F = wg.shape[1]
    tm = _pick_row_tile(M)
    tf = _pick_col_tile(F)
    return pl.pallas_call(
        _norm_mlp_kernel,
        out_shape=jax.ShapeDtypeStruct((M, H), jnp.bfloat16),
        grid=(M // tm, F // tf),
        in_specs=[
            pl.BlockSpec((tm, H), lambda i, j: (i, 0)),
            _const_spec((1, H), lambda i, j: (0, 0)),
            pl.BlockSpec((H, tf), lambda i, j: (0, j)),
            pl.BlockSpec((H, tf), lambda i, j: (0, j)),
            pl.BlockSpec((tf, H), lambda i, j: (j, 0)),
        ],
        out_specs=pl.BlockSpec((tm, H), lambda i, j: (i, 0)),
        scratch_shapes=[pltpu.VMEM((tm, H), jnp.bfloat16),
                        pltpu.VMEM((tm, H), jnp.float32)],
        compiler_params=pltpu.CompilerParams(
            dimension_semantics=("parallel", "arbitrary"),
            vmem_limit_bytes=_VMEM_LIMIT),
    )(x, norm_w.reshape(1, H), wg, wu, wd)


# -------------------- kernel 4: final RMSNorm + lm_head (tiled) -----------------
# grid = (M//tm, V//tn); vocab axis innermost ("arbitrary") so the normalized row block is
# computed once into scratch and reused across vocab tiles.

def _norm_head_kernel(x_ref, nw_ref, w_ref, o_ref, h_scr):
    @pl.when(pl.program_id(1) == 0)
    def _():
        x = x_ref[...].astype(jnp.float32)
        var = jnp.mean(x * x, axis=-1, keepdims=True)
        h_scr[...] = ((x * lax.rsqrt(var + 1e-6)) * nw_ref[...]).astype(jnp.bfloat16)

    o_ref[...] = jnp.dot(h_scr[...], w_ref[...], preferred_element_type=jnp.float32)


@jax.jit
def fused_norm_head(x, norm_w, w):
    M, H = x.shape
    V = w.shape[1]
    tm = _pick_row_tile(M)
    tn = _pick_col_tile(V)
    return pl.pallas_call(
        _norm_head_kernel,
        out_shape=jax.ShapeDtypeStruct((M, V), jnp.float32),
        grid=(M // tm, V // tn),
        in_specs=[
            pl.BlockSpec((tm, H), lambda i, j: (i, 0)),
            _const_spec((1, H), lambda i, j: (0, 0)),
            pl.BlockSpec((H, tn), lambda i, j: (0, j)),
        ],
        out_specs=pl.BlockSpec((tm, tn), lambda i, j: (i, j)),
        scratch_shapes=[pltpu.VMEM((tm, H), jnp.bfloat16)],
        compiler_params=pltpu.CompilerParams(
            dimension_semantics=("parallel", "arbitrary"),
            vmem_limit_bytes=_VMEM_LIMIT),
    )(x, norm_w.reshape(1, H), w)


# --------------------------- tiny LLaMA base model ------------------------------

class TinyLlamaBase:
    def __init__(self, vocab, num_layers, num_heads, head_dim, mlp_dim, key):
        self.vocab = vocab
        self.num_layers = num_layers
        self.num_heads = num_heads
        self.head_dim = head_dim
        self.hidden = num_heads * head_dim
        H, F, hd = self.hidden, mlp_dim, head_dim
        ks = jax.random.split(key, 3 + num_layers)
        s = 0.02
        self.embed = s * jax.random.normal(ks[0], (vocab, H), jnp.float32)
        self.lm_head = (s * jax.random.normal(ks[1], (H, vocab), jnp.float32)).astype(jnp.bfloat16)
        self.final_norm = jnp.ones((H,), jnp.float32)
        self.layers = []
        for l in range(num_layers):
            lk = jax.random.split(ks[3 + l], 7)
            wq = s * jax.random.normal(lk[0], (H, H), jnp.float32)
            wk = s * jax.random.normal(lk[1], (H, H), jnp.float32)
            wv = s * jax.random.normal(lk[2], (H, H), jnp.float32)
            wo = s * jax.random.normal(lk[3], (H, H), jnp.float32)
            # Per-head column blocks [wq_h | wk_h | wv_h] -> (nh, H, 3*hd) bf16 so kernel 1 can
            # column-tile the QKV projection by head.
            wqkv_heads = jnp.stack([
                jnp.concatenate([wq[:, h * hd:(h + 1) * hd],
                                 wk[:, h * hd:(h + 1) * hd],
                                 wv[:, h * hd:(h + 1) * hd]], axis=1)
                for h in range(num_heads)], axis=0).astype(jnp.bfloat16)
            self.layers.append(dict(
                attn_norm=jnp.ones((H,), jnp.float32),
                wqkv_heads=wqkv_heads,                                          # (nh, H, 3hd)
                wo=wo.reshape(num_heads, hd, H).astype(jnp.bfloat16),           # (nh, hd, H)
                mlp_norm=jnp.ones((H,), jnp.float32),
                wg=(s * jax.random.normal(lk[4], (H, F), jnp.float32)).astype(jnp.bfloat16),
                wu=(s * jax.random.normal(lk[5], (H, F), jnp.float32)).astype(jnp.bfloat16),
                wd=(s * jax.random.normal(lk[6], (F, H), jnp.float32)).astype(jnp.bfloat16),
            ))

    def __call__(self, input_ids, past_key_values=None, use_cache=True):
        B, S = input_ids.shape
        nh, hd, H = self.num_heads, self.head_dim, self.hidden
        # Residual stream kept in bf16 between kernels (f32 math inside the kernels).
        x = jnp.take(self.embed, input_ids, axis=0).astype(jnp.bfloat16)   # (B, S, H)
        offset = 0 if past_key_values is None else past_key_values[0][0].shape[2]

        # Compact (S, hd) RoPE tables, hoisted out of the layer loop.
        half = hd // 2
        inv_freq = 1.0 / (10000.0 ** (jnp.arange(half, dtype=jnp.float32) * 2.0 / hd))
        pos = offset + jnp.arange(S, dtype=jnp.float32)
        ang = pos[:, None] * inv_freq[None, :]                              # (S, half)
        cos = jnp.concatenate([jnp.cos(ang), jnp.cos(ang)], axis=-1)        # (S, hd)
        sin = jnp.concatenate([jnp.sin(ang), jnp.sin(ang)], axis=-1)

        new_kv = []
        for l, p in enumerate(self.layers):
            # q/k/v emitted directly in bf16 (B, nh, S, hd) cache layout (no XLA transposes).
            q, k_new, v_new = fused_norm_qkv_rope(x, p["attn_norm"], p["wqkv_heads"], cos, sin)
            if past_key_values is not None:
                pk, pv = past_key_values[l]
                # TODO(synk): preallocate a (B, nh, T_max, hd) bf16 cache and use
                # lax.dynamic_update_slice for an autoregressive decode loop instead of
                # re-copying the whole past each layer.
                full_k = jnp.concatenate([pk.astype(jnp.bfloat16), k_new], axis=2)
                full_v = jnp.concatenate([pv.astype(jnp.bfloat16), v_new], axis=2)
            else:
                full_k, full_v = k_new, v_new
            x = fused_attention_wo(x, q, full_k, full_v, p["wo"])           # residual fused
            x = fused_norm_mlp(x.reshape(B * S, H), p["mlp_norm"],
                               p["wg"], p["wu"], p["wd"]).reshape(B, S, H)  # residual fused
            new_kv.append((full_k, full_v))

        logits = fused_norm_head(x.reshape(B * S, H), self.final_norm,
                                 self.lm_head).reshape(B, S, self.vocab)
        return logits, (tuple(new_kv) if use_cache else None)


# --------------------------- CustomLlamaModel wrapper ---------------------------

class CustomLlamaModelPallas:
    def __init__(self, base_model, head_dim, num_heads, num_layers, key):
        self.base_model = base_model
        self.head_dim = head_dim
        self.num_heads = num_heads
        self.num_layers = num_layers
        ks = jax.random.split(key, 2 * num_layers)
        # nn.init.normal_(torch.empty(1, num_heads, 1, head_dim, dtype=torch.bfloat16))
        self.trainable_key_caches = [
            jax.random.normal(ks[2 * i], (1, num_heads, 1, head_dim)).astype(jnp.bfloat16)
            for i in range(num_layers)]
        self.trainable_value_caches = [
            jax.random.normal(ks[2 * i + 1], (1, num_heads, 1, head_dim)).astype(jnp.bfloat16)
            for i in range(num_layers)]

    def __call__(self, input_ids, attention_mask=None, labels=None,
                 past_key_values=None, use_cache=True):
        # TODO(synk): labels -> cross-entropy loss (HF CausalLMOutput) is not reproduced here.
        if past_key_values is not None:
            B = past_key_values[0][0].shape[0]
            # TODO(synk): generate_kv_with_id / concat_kv memory-grouping helpers are undefined
            # in the reference; only the core semantics (broadcast trainable bf16 KV over the
            # batch and append along the sequence axis of past_key_values) is reproduced.
            extended = []
            for l in range(self.num_layers):
                pk, pv = past_key_values[l]
                tk = jnp.broadcast_to(
                    self.trainable_key_caches[l].astype(pk.dtype),
                    (B, self.num_heads, 1, self.head_dim))
                tv = jnp.broadcast_to(
                    self.trainable_value_caches[l].astype(pv.dtype),
                    (B, self.num_heads, 1, self.head_dim))
                extended.append((jnp.concatenate([pk, tk], axis=2),
                                 jnp.concatenate([pv, tv], axis=2)))
            return self.base_model(input_ids, past_key_values=tuple(extended),
                                   use_cache=use_cache)
        return self.base_model(input_ids)


# ------------------------------------- main -------------------------------------

if __name__ == "__main__":
    # Decide single-buffered weight-spec support once, up front.
    _use_buffered_one()

    head_dim = 8
    num_heads = 4
    num_layers = 2
    vocab = 64
    mlp_dim = 64
    B, S = 2, 8
    past_len = 4

    root = jax.random.PRNGKey(0)
    k_base, k_wrap, k_ids, k_past = jax.random.split(root, 4)

    base = TinyLlamaBase(vocab, num_layers, num_heads, head_dim, mlp_dim, k_base)
    model = CustomLlamaModelPallas(base, head_dim, num_heads, num_layers, k_wrap)

    input_ids = jax.random.randint(k_ids, (B, S), 0, vocab, dtype=jnp.int32)

    pks = jax.random.split(k_past, 2 * num_layers)
    # KV cache kept in bf16 end-to-end (matches an HF bf16 model).
    past_key_values = tuple(
        ((0.1 * jax.random.normal(pks[2 * l], (B, num_heads, past_len, head_dim),
                                  jnp.float32)).astype(jnp.bfloat16),
         (0.1 * jax.random.normal(pks[2 * l + 1], (B, num_heads, past_len, head_dim),
                                  jnp.float32)).astype(jnp.bfloat16))
        for l in range(num_layers))

    # branch 1: no past_key_values
    logits_a, kv_a = model(input_ids)
    # branch 2: with past_key_values (trainable bf16 KV appended along axis=2)
    logits_b, kv_b = model(input_ids, past_key_values=past_key_values)

    jax.block_until_ready(logits_a)
    jax.block_until_ready(logits_b)

    assert logits_a.shape == (B, S, vocab)
    assert logits_b.shape == (B, S, vocab)
    assert kv_a[0][0].shape == (B, num_heads, S, head_dim)
    # past (4) + trainable (1) + new tokens (8) = 13 cached positions per layer
    assert kv_b[0][0].shape == (B, num_heads, past_len + 1 + S, head_dim)
    assert bool(jnp.all(jnp.isfinite(logits_a)))
    assert bool(jnp.all(jnp.isfinite(logits_b)))

    print("KERNEL_OK")
</pallas_src>

<mosaic_0001>
module attributes {stable_mosaic.version = 11 : i64} {
  func.func @_k(%arg0: i32, %arg1: memref<8x128xf32, #tpu.memory_space<vmem>>, %arg2: memref<8x128xf32, #tpu.memory_space<vmem>>) attributes {dimension_semantics = [#tpu.dimension_semantics<arbitrary>], iteration_bounds = array<i64: 2>, scalar_prefetch = 0 : i64, scratch_operands = 0 : i64, tpu.core_type = #tpu.core_type<tc>, window_params = [{pipeline_mode = #tpu.pipeline_mode<synchronous>, transform_indices = @transform_0, window_bounds = array<i64: 8, 128>}, {pipeline_mode = #tpu.pipeline_mode<synchronous>, transform_indices = @transform_1, window_bounds = array<i64: 8, 128>}]} {
    %c0 = arith.constant 0 : index
    %c0_0 = arith.constant 0 : index
    %0 = vector.load %arg1[%c0, %c0_0] : memref<8x128xf32, #tpu.memory_space<vmem>>, vector<8x128xf32>
    %cst = arith.constant 1.000000e+00 : f32
    %1 = vector.broadcast %cst : f32 to vector<8x128xf32>
    %2 = arith.addf %0, %1 : vector<8x128xf32>
    %c0_1 = arith.constant 0 : index
    %c0_2 = arith.constant 0 : index
    %3 = vector.load %arg2[%c0_1, %c0_2] : memref<8x128xf32, #tpu.memory_space<vmem>>, vector<8x128xf32>
    tpu.vector_store %arg2[%c0_1, %c0_2], %2 {strides = array<i32>} : memref<8x128xf32, #tpu.memory_space<vmem>>, vector<8x128xf32>,
    return
  }
  func.func @transform_0(%arg0: i32) -> (i32, i32) {
    %c0_i32 = arith.constant 0 : i32
    %c0_i32_0 = arith.constant 0 : i32
    %c0_i32_1 = arith.constant 0 : i32
    return %c0_i32, %c0_i32_0 : i32, i32
  }
  func.func @transform_1(%arg0: i32) -> (i32, i32) {
    %c0_i32 = arith.constant 0 : i32
    %c0_i32_0 = arith.constant 0 : i32
    %c0_i32_1 = arith.constant 0 : i32
    return %c0_i32, %c0_i32_0 : i32, i32
  }
}

module attributes {stable_mosaic.version = 11 : i64} {
  func.func @_norm_qkv_rope_kernel(%arg0: i32, %arg1: i32, %arg2: i32, %arg3: memref<1x8x32xbf16, #tpu.memory_space<vmem>>, %arg4: memref<1x32xf32, #tpu.memory_space<vmem>>, %arg5: memref<1x32x24xbf16, #tpu.memory_space<vmem>>, %arg6: memref<8x8xf32, #tpu.memory_space<vmem>>, %arg7: memref<8x8xf32, #tpu.memory_space<vmem>>, %arg8: memref<1x1x8x8xbf16, #tpu.memory_space<vmem>>, %arg9: memref<1x1x8x8xbf16, #tpu.memory_space<vmem>>, %arg10: memref<1x1x8x8xbf16, #tpu.memory_space<vmem>>, %arg11: memref<8x32xbf16, #tpu.memory_space<vmem>>) attributes {dimension_semantics = [#tpu.dimension_semantics<parallel>, #tpu.dimension_semantics<parallel>, #tpu.dimension_semantics<arbitrary>], iteration_bounds = array<i64: 2, 1, 4>, scalar_prefetch = 0 : i64, scratch_operands = 1 : i64, tpu.core_type = #tpu.core_type<tc>, window_params = [{transform_indices = @transform_0, window_bounds = array<i64: 1, 8, 32>}, {pipeline_mode = #tpu.pipeline_mode<synchronous>, transform_indices = @transform_1, window_bounds = array<i64: 1, 32>}, {transform_indices = @transform_2, window_bounds = array<i64: 1, 32, 24>}, {transform_indices = @transform_3, window_bounds = array<i64: 8, 8>}, {transform_indices = @transform_4, window_bounds = array<i64: 8, 8>}, {transform_indices = @transform_5, window_bounds = array<i64: 1, 1, 8, 8>}, {transform_indices = @transform_6, window_bounds = array<i64: 1, 1, 8, 8>}, {transform_indices = @transform_7, window_bounds = array<i64: 1, 1, 8, 8>}]} {
    %c0_i32 = arith.constant 0 : i32
    %0 = arith.cmpi eq, %arg2, %c0_i32 : i32
    %1 = arith.extui %0 : i1 to i32
    %c0_i32_0 = arith.constant 0 : i32
    %2 = arith.cmpi ne, %1, %c0_i32_0 : i32
    scf.if %2 {
      %c0_23 = arith.constant 0 : index
      %c0_24 = arith.constant 0 : index
      %c0_25 = arith.constant 0 : index
      %40 = vector.load %arg3[%c0_23, %c0_24, %c0_25] : memref<1x8x32xbf16, #tpu.memory_space<vmem>>, vector<1x8x32xbf16>
      %41 = vector.shape_cast %40 : vector<1x8x32xbf16> to vector<8x32xbf16>
      %42 = arith.extf %41 : vector<8x32xbf16> to vector<8x32xf32>
      %43 = arith.mulf %42, %42 : vector<8x32xf32>
      %cst_26 = arith.constant dense<0.000000e+00> : vector<8xf32>
      %44 = vector.multi_reduction <add>, %43, %cst_26 [1] : vector<8x32xf32> to vector<8xf32>
      %45 = vector.shape_cast %44 : vector<8xf32> to vector<8x1xf32>
      %cst_27 = arith.constant 3.200000e+01 : f32
      %46 = vector.broadcast %cst_27 : f32 to vector<8x1xf32>
      %47 = arith.divf %45, %46 : vector<8x1xf32>
      %cst_28 = arith.constant 9.99999997E-7 : f32
      %48 = vector.broadcast %cst_28 : f32 to vector<8x1xf32>
      %49 = arith.addf %47, %48 : vector<8x1xf32>
      %50 = math.rsqrt %49 : vector<8x1xf32>
      %51 = vector.broadcast %50 : vector<8x1xf32> to vector<8x32xf32>
      %52 = arith.mulf %42, %51 : vector<8x32xf32>
      %c0_29 = arith.constant 0 : index
      %c0_30 = arith.constant 0 : index
      %53 = vector.load %arg4[%c0_29, %c0_30] : memref<1x32xf32, #tpu.memory_space<vmem>>, vector<1x32xf32>
      %54 = vector.broadcast %53 : vector<1x32xf32> to vector<8x32xf32>
      %55 = arith.mulf %52, %54 : vector<8x32xf32>
      %56 = arith.truncf %55 : vector<8x32xf32> to vector<8x32xbf16>
      %c0_31 = arith.constant 0 : index
      %c0_32 = arith.constant 0 : index
      %57 = vector.load %arg11[%c0_31, %c0_32] : memref<8x32xbf16, #tpu.memory_space<vmem>>, vector<8x32xbf16>
      tpu.vector_store %arg11[%c0_31, %c0_32], %56 {strides = array<i32>} : memref<8x32xbf16, #tpu.memory_space<vmem>>, vector<8x32xbf16>,
    } else {
    }
    %c0 = arith.constant 0 : index
    %c0_1 = arith.constant 0 : index
    %3 = vector.load %arg11[%c0, %c0_1] : memref<8x32xbf16, #tpu.memory_space<vmem>>, vector<8x32xbf16>
    %c0_2 = arith.constant 0 : index
    %c0_3 = arith.constant 0 : index
    %c0_4 = arith.constant 0 : index
    %4 = vector.load %arg5[%c0_2, %c0_3, %c0_4] : memref<1x32x24xbf16, #tpu.memory_space<vmem>>, vector<1x32x24xbf16>
    %5 = vector.shape_cast %4 : vector<1x32x24xbf16> to vector<32x24xbf16>
    %cst = arith.constant dense<0.000000e+00> : vector<8x24xf32>
    %6 = tpu.matmul %3, %5, %cst {dimension_numbers = #tpu.dot_dimension_numbers<[1], [0], [0], [1], [0, 0, 1, 1], [], []>} : vector<8x32xbf16>, vector<32x24xbf16>, vector<8x24xf32> -> vector<8x24xf32>
    %7 = vector.extract_strided_slice %6 {offsets = [0, 0], sizes = [8, 8], strides = [1, 1]} : vector<8x24xf32> to vector<8x8xf32>
    %8 = vector.extract_strided_slice %6 {offsets = [0, 8], sizes = [8, 8], strides = [1, 1]} : vector<8x24xf32> to vector<8x8xf32>
    %9 = vector.extract_strided_slice %6 {offsets = [0, 16], sizes = [8, 8], strides = [1, 1]} : vector<8x24xf32> to vector<8x8xf32>
    %c0_5 = arith.constant 0 : index
    %c0_6 = arith.constant 0 : index
    %10 = vector.load %arg6[%c0_5, %c0_6] : memref<8x8xf32, #tpu.memory_space<vmem>>, vector<8x8xf32>
    %c0_7 = arith.constant 0 : index
    %c0_8 = arith.constant 0 : index
    %11 = vector.load %arg7[%c0_7, %c0_8] : memref<8x8xf32, #tpu.memory_space<vmem>>, vector<8x8xf32>
    %12 = vector.extract_strided_slice %7 {offsets = [0, 4], sizes = [8, 4], strides = [1, 1]} : vector<8x8xf32> to vector<8x4xf32>
    %cst_9 = arith.constant 0.000000e+00 : f32
    %13 = vector.broadcast %cst_9 : f32 to vector<8x4xf32>
    %14 = arith.subf %13, %12 : vector<8x4xf32>
    %15 = vector.extract_strided_slice %7 {offsets = [0, 0], sizes = [8, 4], strides = [1, 1]} : vector<8x8xf32> to vector<8x4xf32>
    %16 = tpu.concatenate %14, %15 in 1 : vector<8x4xf32>, vector<8x4xf32> -> vector<8x8xf32>
    %17 = arith.mulf %7, %10 : vector<8x8xf32>
    %18 = arith.mulf %16, %11 : vector<8x8xf32>
    %19 = arith.addf %17, %18 : vector<8x8xf32>
    %20 = arith.truncf %19 : vector<8x8xf32> to vector<8x8xbf16>
    %c0_10 = arith.constant 0 : index
    %c0_11 = arith.constant 0 : index
    %c0_12 = arith.constant 0 : index
    %c0_13 = arith.constant 0 : index
    %21 = vector.load %arg8[%c0_10, %c0_11, %c0_12, %c0_13] : memref<1x1x8x8xbf16, #tpu.memory_space<vmem>>, vector<1x1x8x8xbf16>
    %22 = vector.shape_cast %21 : vector<1x1x8x8xbf16> to vector<8x8xbf16>
    %23 = vector.shape_cast %20 : vector<8x8xbf16> to vector<1x1x8x8xbf16>
    tpu.vector_store %arg8[%c0_10, %c0_11, %c0_12, %c0_13], %23 {strides = array<i32>} : memref<1x1x8x8xbf16, #tpu.memory_space<vmem>>, vector<1x1x8x8xbf16>,
    %24 = vector.extract_strided_slice %8 {offsets = [0, 4], sizes = [8, 4], strides = [1, 1]} : vector<8x8xf32> to vector<8x4xf32>
    %cst_14 = arith.constant 0.000000e+00 : f32
    %25 = vector.broadcast %cst_14 : f32 to vector<8x4xf32>
    %26 = arith.subf %25, %24 : vector<8x4xf32>
    %27 = vector.extract_strided_slice %8 {offsets = [0, 0], sizes = [8, 4], strides = [1, 1]} : vector<8x8xf32> to vector<8x4xf32>
    %28 = tpu.concatenate %26, %27 in 1 : vector<8x4xf32>, vector<8x4xf32> -> vector<8x8xf32>
    %29 = arith.mulf %8, %10 : vector<8x8xf32>
    %30 = arith.mulf %28, %11 : vector<8x8xf32>
    %31 = arith.addf %29, %30 : vector<8x8xf32>
    %32 = arith.truncf %31 : vector<8x8xf32> to vector<8x8xbf16>
    %c0_15 = arith.constant 0 : index
    %c0_16 = arith.constant 0 : index
    %c0_17 = arith.constant 0 : index
    %c0_18 = arith.constant 0 : index
    %33 = vector.load %arg9[%c0_15, %c0_16, %c0_17, %c0_18] : memref<1x1x8x8xbf16, #tpu.memory_space<vmem>>, vector<1x1x8x8xbf16>
    %34 = vector.shape_cast %33 : vector<1x1x8x8xbf16> to vector<8x8xbf16>
    %35 = vector.shape_cast %32 : vector<8x8xbf16> to vector<1x1x8x8xbf16>
    tpu.vector_store %arg9[%c0_15, %c0_16, %c0_17, %c0_18], %35 {strides = array<i32>} : memref<1x1x8x8xbf16, #tpu.memory_space<vmem>>, vector<1x1x8x8xbf16>,
    %36 = arith.truncf %9 : vector<8x8xf32> to vector<8x8xbf16>
    %c0_19 = arith.constant 0 : index
    %c0_20 = arith.constant 0 : index
    %c0_21 = arith.constant 0 : index
    %c0_22 = arith.constant 0 : index
    %37 = vector.load %arg10[%c0_19, %c0_20, %c0_21, %c0_22] : memref<1x1x8x8xbf16, #tpu.memory_space<vmem>>, vector<1x1x8x8xbf16>
    %38 = vector.shape_cast %37 : vector<1x1x8x8xbf16> to vector<8x8xbf16>
    %39 = vector.shape_cast %36 : vector<8x8xbf16> to vector<1x1x8x8xbf16>
    tpu.vector_store %arg10[%c0_19, %c0_20, %c0_21, %c0_22], %39 {strides = array<i32>} : memref<1x1x8x8xbf16, #tpu.memory_space<vmem>>, vector<1x1x8x8xbf16>,
    return
  }
  func.func @transform_0(%arg0: i32, %arg1: i32, %arg2: i32) -> (i32, i32, i32) {
    %c0_i32 = arith.constant 0 : i32
    %c0_i32_0 = arith.constant 0 : i32
    return %arg0, %arg1, %c0_i32 : i32, i32, i32
  }
  func.func @transform_1(%arg0: i32, %arg1: i32, %arg2: i32) -> (i32, i32) {
    %c0_i32 = arith.constant 0 : i32
    %c0_i32_0 = arith.constant 0 : i32
    %c0_i32_1 = arith.constant 0 : i32
    return %c0_i32, %c0_i32_0 : i32, i32
  }
  func.func @transform_2(%arg0: i32, %arg1: i32, %arg2: i32) -> (i32, i32, i32) {
    %c0_i32 = arith.constant 0 : i32
    %c0_i32_0 = arith.constant 0 : i32
    %c0_i32_1 = arith.constant 0 : i32
    return %arg2, %c0_i32, %c0_i32_0 : i32, i32, i32
  }
  func.func @transform_3(%arg0: i32, %arg1: i32, %arg2: i32) -> (i32, i32) {
    %c0_i32 = arith.constant 0 : i32
    %c0_i32_0 = arith.constant 0 : i32
    return %arg1, %c0_i32 : i32, i32
  }
  func.func @transform_4(%arg0: i32, %arg1: i32, %arg2: i32) -> (i32, i32) {
    %c0_i32 = arith.constant 0 : i32
    %c0_i32_0 = arith.constant 0 : i32
    return %arg1, %c0_i32 : i32, i32
  }
  func.func @transform_5(%arg0: i32, %arg1: i32, %arg2: i32) -> (i32, i32, i32, i32) {
    %c0_i32 = arith.constant 0 : i32
    %c0_i32_0 = arith.constant 0 : i32
    return %arg0, %arg2, %arg1, %c0_i32 : i32, i32, i32, i32
  }
  func.func @transform_6(%arg0: i32, %arg1: i32, %arg2: i32) -> (i32, i32, i32, i32) {
    %c0_i32 = arith.constant 0 : i32
    %c0_i32_0 = arith.constant 0 : i32
    return %arg0, %arg2, %arg1, %c0_i32 : i32, i32, i32, i32
  }
  func.func @transform_7(%arg0: i32, %arg1: i32, %arg2: i32) -> (i32, i32, i32, i32) {
    %c0_i32 = arith.constant 0 : i32
    %c0_i32_0 = arith.constant 0 : i32
    return %arg0, %arg2, %arg1, %c0_i32 : i32, i32, i32, i32
  }
}

</mosaic_0001>

<llo_original>
// kernel: tpu_custom_call.1
$region0: #{tpu_custom_call.1}
  #allocation0 [shape = 'u32[]', space=smem, size = 0x4, offset = 0x4, fixed_abs, tag = 'smem constant byte address 0x4 - core index']
  #allocation1 [shape = 'u32[72,128]{1,0:T(1,128)}', space=vmem, size = 0x9000, scoped, tag = 'internal scratch']
  %s0 = inlined_call_operand.hbm [shape: f32[8,128], index: 0, kind: input, shape index: {}]
  %s1 = inlined_call_operand.hbm [shape: f32[8,128], index: 1, kind: output, shape index: {}]
  %s2 = sld [smem:[#allocation0]]
  $region41: #{tpu_custom_call.1} parent=0
    _
  %s4 = ssub.s32 1, %s2
  %s5 = scalar_select 0, %s4, %s2
  $region1: #{tpu_custom_call.1} parent=0
    #allocation2 [shape = 'u8[4096]{0}', space=vmem, size = 0x1000, scoped, tag = 'input window, operand 0, single buffered']
    #allocation3 [shape = 's32[2]{0}', space=sflag, size = 0x8, scoped, tag = 'scoped memory for tpu_custom_call.1']
    #allocation4 [shape = 's32[2]{0}', space=sflag, size = 0x8, scoped, tag = 'scoped memory for tpu_custom_call.1']
    #allocation5 [shape = 'u8[4096]{0}', space=vmem, size = 0x1000, scoped, tag = 'output window, operand 0, single buffered']
    %6 = vsyncpa [#allocation3], 0
    %7 = vsyncpa [#allocation4], 0
    loop: start=0, step=1, limit=4
    $region2: #{tpu_custom_call.1} parent=1 // loop_pre_header
      _
    $region3: #{tpu_custom_call.1} parent=1 // loop_header
      %s9 = sphi 0, %s13
      %p10 = scmp.ge.s32.totalorder %s9, 4
      %s17 = sphi 0, %s17
      %s19 = sphi 0, %s17
      %s20 = sphi 0, %s19
      %s34 = sphi 0, %s20
      %s38 = sphi 0, %s38
      %s40 = sphi 0, %s38
      %s41 = sphi 0, %s40
      %s55 = sphi 0, %s41
    $region4: #{tpu_custom_call.1} parent=1 // loop_header_branch
      %12 = sbr.rel (%p10) target = $region8
    $region5: #{tpu_custom_call.1} parent=1 // loop_body
      %s14 = ssub.s32 %s9, 1
      %s15 = ssub.s32 %s9, 2
      %s16 = sadd.s32 %s9, 1
      %s18 = sadd.s32 %s17, 1
      %p21 = scmp.eq.s32.totalorder %s9, 1
      %p22 = scmp.ne.s32.totalorder %s17, %s19
      %p23 = scmp.eq.s32.totalorder %s9, 0
      %p24 = por %p22, %p23
      %p25 = scmp.ne.s32.totalorder %s17, %s19
      %p26 = scmp.eq.s32.totalorder %s14, 1
      %p27 = por %p25, %p26
      %p28 = scmp.ne.s32.totalorder %s19, %s20
      %p29 = scmp.eq.s32.totalorder %s14, 0
      %p30 = por %p28, %p29
      %p31 = scmp.ne.s32.totalorder %s19, %s20
      %p32 = scmp.eq.s32.totalorder %s15, 1
      %p33 = por %p31, %p32
      %p35 = scmp.ne.s32.totalorder %s20, %s34
      %p36 = scmp.eq.s32.totalorder %s15, 0
      %p37 = por %p35, %p36
      %s39 = sadd.s32 %s38, 1
      %p42 = scmp.eq.s32.totalorder %s9, 1
      %p43 = scmp.ne.s32.totalorder %s38, %s40
      %p44 = scmp.eq.s32.totalorder %s9, 0
      %p45 = por %p43, %p44
      %p46 = scmp.ne.s32.totalorder %s38, %s40
      %p47 = scmp.eq.s32.totalorder %s14, 1
      %p48 = por %p46, %p47
      %p49 = scmp.ne.s32.totalorder %s40, %s41
      %p50 = scmp.eq.s32.totalorder %s14, 0
      %p51 = por %p49, %p50
      %p52 = scmp.ne.s32.totalorder %s40, %s41
      %p53 = scmp.eq.s32.totalorder %s15, 1
      %p54 = por %p52, %p53
      %p56 = scmp.ne.s32.totalorder %s41, %s55
      %p57 = scmp.eq.s32.totalorder %s15, 0
      %p58 = por %p56, %p57
      %p59 = scmp.le.s32.totalorder 1, %s9
      %p60 = scmp.lt.s32.totalorder %s9, 3
      %p61 = pnand %p59, %p60
      %p62 = pneg %p61
      // Predicated region
      $region9: #{tpu_custom_call.1} parent=5 // pred_check
        _
      $region10: #{tpu_custom_call.1} parent=5 // pred_check_branch
        %64 = sbr.rel (%p61) target = $region12
      $region11: #{tpu_custom_call.1} parent=5 // pred_region
        %s65 = ssub.s32 %s9, 1
        // Predicated region
        $region13: #{tpu_custom_call.1} parent=11 // pred_check
          %p66 = pneg %p30
        $region14: #{tpu_custom_call.1} parent=11 // pred_check_branch
          %68 = sbr.rel (%p66) target = $region16
        $region15: #{tpu_custom_call.1} parent=11 // pred_region
          %70 = vsyncadd [#allocation3], 0
          %s72 = sshll.u32 %s0, 4
          %s73 = int_to_ptr.hbm [resolvable:$true] %s72
          %s74 = sshll.u32 [#allocation2], 4
          %s75 = int_to_ptr.vmem [resolvable:$true] %s74
          %77 = dma.hbm_to_vmem [thread:$0]  %s73, 128, %s75, [#allocation3]
        $region16: #{tpu_custom_call.1} parent=11 // pred_fallthru
          _
      $region12: #{tpu_custom_call.1} parent=5 // pred_fallthru
        _
      %p78 = scmp.lt.s32.totalorder %s9, 2
      // Predicated region
      $region17: #{tpu_custom_call.1} parent=5 // pred_check
        %p79 = pneg %p78
      $region18: #{tpu_custom_call.1} parent=5 // pred_check_branch
        %81 = sbr.rel (%p79) target = $region20
      $region19: #{tpu_custom_call.1} parent=5 // pred_region
        _
      $region20: #{tpu_custom_call.1} parent=5 // pred_fallthru
        _
      %p82 = scmp.le.s32.totalorder 1, %s9
      %p83 = scmp.lt.s32.totalorder %s9, 3
      %p84 = pnand %p82, %p83
      %p85 = pneg %p84
      // Predicated region
      $region21: #{tpu_custom_call.1} parent=5 // pred_check
        _
      $region22: #{tpu_custom_call.1} parent=5 // pred_check_branch
        %87 = sbr.rel (%p84) target = $region24
      $region23: #{tpu_custom_call.1} parent=5 // pred_region
        %s88 = ssub.s32 %s9, 1
        // Predicated region
        $region25: #{tpu_custom_call.1} parent=23 // pred_check
          %p89 = pneg %p30
        $region26: #{tpu_custom_call.1} parent=23 // pred_check_branch
          %91 = sbr.rel (%p89) target = $region28
        $region27: #{tpu_custom_call.1} parent=23 // pred_region
          %93 = dma.done [#allocation3], 128
        $region28: #{tpu_custom_call.1} parent=23 // pred_fallthru
          _
        %p94 = pneg %p30
        %p95 = pneg %p27
        %p96 = pneg %p51
        %p97 = pneg %p48
        %v98 = vld [vmem:[#allocation2] sm:$0xff]
        %v99 = vadd.f32 %v98, 1.0
        %100 = vst [vmem:[#allocation5] sm:$0xff] %v99
        // Predicated region
        $region29: #{tpu_custom_call.1} parent=23 // pred_check
          %p101 = pneg %p48
        $region30: #{tpu_custom_call.1} parent=23 // pred_check_branch
          %103 = sbr.rel (%p101) target = $region32
        $region31: #{tpu_custom_call.1} parent=23 // pred_region
          %105 = vsyncadd [#allocation4], 0
          %s107 = sshll.u32 [#allocation5], 4
          %s108 = int_to_ptr.vmem [resolvable:$true] %s107
          %s109 = sshll.u32 %s1, 4
          %s110 = int_to_ptr.hbm [resolvable:$true] %s109
          %112 = dma.vmem_to_hbm [thread:$0]  %s108, 128, %s110, [#allocation4]
        $region32: #{tpu_custom_call.1} parent=23 // pred_fallthru
          _
        // Predicated region
        $region33: #{tpu_custom_call.1} parent=23 // pred_check
          %p113 = pneg %p48
        $region34: #{tpu_custom_call.1} parent=23 // pred_check_branch
          %115 = sbr.rel (%p113) target = $region36
        $region35: #{tpu_custom_call.1} parent=23 // pred_region
          %117 = dma.done [#allocation4], 128
        $region36: #{tpu_custom_call.1} parent=23 // pred_fallthru
          _
      $region24: #{tpu_custom_call.1} parent=5 // pred_fallthru
        _
      %p118 = scmp.le.s32.totalorder 2, %s9
      // Predicated region
      $region37: #{tpu_custom_call.1} parent=5 // pred_check
        %p119 = pneg %p118
      $region38: #{tpu_custom_call.1} parent=5 // pred_check_branch
        %121 = sbr.rel (%p119) target = $region40
      $region39: #{tpu_custom_call.1} parent=5 // pred_region
        %s122 = ssub.s32 %s9, 2
      $region40: #{tpu_custom_call.1} parent=5 // pred_fallthru
        _
    $region6: #{tpu_custom_call.1} parent=1 // loop_footer
      %s13 = sadd.s32 1, %s9
    $region7: #{tpu_custom_call.1} parent=1 // loop_footer_branch
      %8 = sbr.rel target = $region3
    $region8: #{tpu_custom_call.1} parent=1 // loop_exit
      _
    %123 = vsyncpa [#allocation3], 1
    %s124 = scalar_lea.sflag [#allocation3], 1
    %125 = vsyncpa %s124, 1
    %126 = vsyncpa [#allocation4], 1
    %s127 = scalar_lea.sflag [#allocation4], 1
    %128 = vsyncpa %s127, 1

// kernel: fused_norm_qkv_rope.1
$region0: #{fused_norm_qkv_rope.1}
  #allocation0 [shape = 'u32[]', space=smem, size = 0x4, offset = 0x4, fixed_abs, tag = 'smem constant byte address 0x4 - core index']
  #allocation1 [shape = 'u32[72,128]{1,0:T(1,128)}', space=vmem, size = 0x9000, scoped, tag = 'internal scratch']
  #allocation2 [shape = 'bf16[8,32]{1,0:T(8,128)(2,1)}', space=vmem, size = 0x800, scoped, tag = 'scratch operand']
  %s0 = inlined_call_operand.vmem [shape: bf16[2,8,32], index: 0, kind: input, shape index: {}]
  %s1 = inlined_call_operand.vmem [shape: f32[1,32], index: 1, kind: input, shape index: {}]
  %s2 = inlined_call_operand.vmem [shape: bf16[4,32,24], index: 2, kind: input, shape index: {}]
  %s3 = inlined_call_operand.vmem [shape: f32[8,8], index: 3, kind: input, shape index: {}]
  %s4 = inlined_call_operand.vmem [shape: f32[8,8], index: 4, kind: input, shape index: {}]
  %s5 = inlined_call_operand.hbm [shape: bf16[2,4,8,8], index: 5, kind: output, shape index: {0}]
  %s6 = inlined_call_operand.hbm [shape: bf16[2,4,8,8], index: 6, kind: output, shape index: {1}]
  %s7 = inlined_call_operand.hbm [shape: bf16[2,4,8,8], index: 7, kind: output, shape index: {2}]
  %8 = xla_tuple %s5, %s6, %s7
  %s9 = sld [smem:[#allocation0]]
  $region73: #{fused_norm_qkv_rope.1} parent=0
    _
  %s11 = ssub.s32 1, %s9
  %s12 = scalar_select 0, %s11, %s9
  $region1: #{fused_norm_qkv_rope.1} parent=0
    #allocation3 [shape = 'u8[4096]{0}', space=vmem, size = 0x1000, scoped, tag = 'output window, operand 0']
    #allocation4 [shape = 's32[2]{0}', space=sflag, size = 0x8, scoped, tag = 'scoped memory for fused_norm_qkv_rope.1']
    #allocation5 [shape = 'u8[4096]{0}', space=vmem, size = 0x1000, scoped, tag = 'output window, operand 1']
    #allocation6 [shape = 's32[2]{0}', space=sflag, size = 0x8, scoped, tag = 'scoped memory for fused_norm_qkv_rope.1']
    #allocation7 [shape = 'u8[4096]{0}', space=vmem, size = 0x1000, scoped, tag = 'output window, operand 2']
    %13 = vsyncpa [#allocation4], 0
    %s14 = scalar_lea.sflag [#allocation4], 1
    %15 = vsyncpa %s14, 0
    %16 = vsyncpa [#allocation6], 0
    %s17 = scalar_lea.sflag [#allocation6], 1
    %18 = vsyncpa %s17, 0
    loop: start=0, step=1, limit=10
    $region2: #{fused_norm_qkv_rope.1} parent=1 // loop_pre_header
      _
    $region3: #{fused_norm_qkv_rope.1} parent=1 // loop_header
      %s20 = sphi 0, %s24
      %p21 = scmp.ge.s32.totalorder %s20, 10
      %s27 = sphi 0, %s46
      %s28 = sphi 0, %s42
      %s29 = sphi 0, %s38
      %s30 = sphi 0, %s27
      %s31 = sphi 0, %s28
      %s32 = sphi 0, %s29
      %s33 = sphi 0, %s30
      %s34 = sphi 0, %s31
      %s35 = sphi 0, %s32
      %s51 = sphi 0, %s53
      %s54 = sphi 0, %s51
      %s55 = sphi 0, %s54
      %s71 = sphi 0, %s55
      %s75 = sphi 0, %s75
      %s77 = sphi 0, %s75
      %s78 = sphi 0, %s77
      %s92 = sphi 0, %s78
      %s98 = sphi 0, %s100
      %s101 = sphi 0, %s98
      %s102 = sphi 0, %s101
      %s118 = sphi 0, %s102
      %s124 = sphi 0, %s126
      %s127 = sphi 0, %s124
      %s128 = sphi 0, %s127
      %s144 = sphi 0, %s128
      %s150 = sphi 0, %s152
      %s153 = sphi 0, %s150
      %s154 = sphi 0, %s153
      %s170 = sphi 0, %s154
      %s180 = sphi 0, %s182
      %s183 = sphi 0, %s180
      %s184 = sphi 0, %s183
      %s200 = sphi 0, %s184
      %s210 = sphi 0, %s212
      %s213 = sphi 0, %s210
      %s214 = sphi 0, %s213
      %s230 = sphi 0, %s214
      %s240 = sphi 0, %s242
      %s243 = sphi 0, %s240
      %s244 = sphi 0, %s243
      %s260 = sphi 0, %s244
    $region4: #{fused_norm_qkv_rope.1} parent=1 // loop_header_branch
      %23 = sbr.rel (%p21) target = $region8
    $region5: #{fused_norm_qkv_rope.1} parent=1 // loop_body
      %s25 = ssub.s32 %s20, 1
      %s26 = ssub.s32 %s20, 2
      %s36 = sadd.s32 1, %s29
      %p37 = scmp.ge.s32.totalorder %s36, 4
      %s38 = scalar_select %p37, 0, %s36
      %s39 = sadd.s32 1, %s28
      %s40 = scalar_select %p37, %s39, %s28
      %p41 = scmp.ge.s32.totalorder %s40, 1
      %s42 = scalar_select %p41, 0, %s40
      %s43 = sadd.s32 1, %s27
      %s44 = scalar_select %p41, %s43, %s27
      %p45 = scmp.ge.s32.totalorder %s44, 2
      %s46 = scalar_select %p45, 0, %s44
      %s47 = ssub.s32 %s27, %s46
      %s48 = ssub.s32 %s28, %s42
      %s49 = sor.u32 %s47, %s48
      %p50 = scmp.eq.s32.totalorder %s49, 0
      %s52 = sadd.s32 %s51, 1
      %s53 = scalar_select %p50, %s51, %s52
      %p56 = pneg %p50
      %p57 = scmp.eq.s32.totalorder %s20, 7
      %p58 = por %p56, %p57
      %p59 = scmp.ne.s32.totalorder %s51, %s54
      %p60 = scmp.eq.s32.totalorder %s20, 0
      %p61 = por %p59, %p60
      %p62 = scmp.ne.s32.totalorder %s51, %s54
      %p63 = scmp.eq.s32.totalorder %s25, 7
      %p64 = por %p62, %p63
      %p65 = scmp.ne.s32.totalorder %s54, %s55
      %p66 = scmp.eq.s32.totalorder %s25, 0
      %p67 = por %p65, %p66
      %p68 = scmp.ne.s32.totalorder %s54, %s55
      %p69 = scmp.eq.s32.totalorder %s26, 7
      %p70 = por %p68, %p69
      %p72 = scmp.ne.s32.totalorder %s55, %s71
      %p73 = scmp.eq.s32.totalorder %s26, 0
      %p74 = por %p72, %p73
      %s76 = sadd.s32 %s75, 1
      %p79 = scmp.eq.s32.totalorder %s20, 7
      %p80 = scmp.ne.s32.totalorder %s75, %s77
      %p81 = scmp.eq.s32.totalorder %s20, 0
      %p82 = por %p80, %p81
      %p83 = scmp.ne.s32.totalorder %s75, %s77
      %p84 = scmp.eq.s32.totalorder %s25, 7
      %p85 = por %p83, %p84
      %p86 = scmp.ne.s32.totalorder %s77, %s78
      %p87 = scmp.eq.s32.totalorder %s25, 0
      %p88 = por %p86, %p87
      %p89 = scmp.ne.s32.totalorder %s77, %s78
      %p90 = scmp.eq.s32.totalorder %s26, 7
      %p91 = por %p89, %p90
      %p93 = scmp.ne.s32.totalorder %s78, %s92
      %p94 = scmp.eq.s32.totalorder %s26, 0
      %p95 = por %p93, %p94
      %s96 = ssub.s32 %s29, %s38
      %p97 = scmp.eq.s32.totalorder %s96, 0
      %s99 = sadd.s32 %s98, 1
      %s100 = scalar_select %p97, %s98, %s99
      %p103 = pneg %p97
      %p104 = scmp.eq.s32.totalorder %s20, 7
      %p105 = por %p103, %p104
      %p106 = scmp.ne.s32.totalorder %s98, %s101
      %p107 = scmp.eq.s32.totalorder %s20, 0
      %p108 = por %p106, %p107
      %p109 = scmp.ne.s32.totalorder %s98, %s101
      %p110 = scmp.eq.s32.totalorder %s25, 7
      %p111 = por %p109, %p110
      %p112 = scmp.ne.s32.totalorder %s101, %s102
      %p113 = scmp.eq.s32.totalorder %s25, 0
      %p114 = por %p112, %p113
      %p115 = scmp.ne.s32.totalorder %s101, %s102
      %p116 = scmp.eq.s32.totalorder %s26, 7
      %p117 = por %p115, %p116
      %p119 = scmp.ne.s32.totalorder %s102, %s118
      %p120 = scmp.eq.s32.totalorder %s26, 0
      %p121 = por %p119, %p120
      %s122 = ssub.s32 %s28, %s42
      %p123 = scmp.eq.s32.totalorder %s122, 0
      %s125 = sadd.s32 %s124, 1
      %s126 = scalar_select %p123, %s124, %s125
      %p129 = pneg %p123
      %p130 = scmp.eq.s32.totalorder %s20, 7
      %p131 = por %p129, %p130
      %p132 = scmp.ne.s32.totalorder %s124, %s127
      %p133 = scmp.eq.s32.totalorder %s20, 0
      %p134 = por %p132, %p133
      %p135 = scmp.ne.s32.totalorder %s124, %s127
      %p136 = scmp.eq.s32.totalorder %s25, 7
      %p137 = por %p135, %p136
      %p138 = scmp.ne.s32.totalorder %s127, %s128
      %p139 = scmp.eq.s32.totalorder %s25, 0
      %p140 = por %p138, %p139
      %p141 = scmp.ne.s32.totalorder %s127, %s128
      %p142 = scmp.eq.s32.totalorder %s26, 7
      %p143 = por %p141, %p142
      %p145 = scmp.ne.s32.totalorder %s128, %s144
      %p146 = scmp.eq.s32.totalorder %s26, 0
      %p147 = por %p145, %p146
      %s148 = ssub.s32 %s28, %s42
      %p149 = scmp.eq.s32.totalorder %s148, 0
      %s151 = sadd.s32 %s150, 1
      %s152 = scalar_select %p149, %s150, %s151
      %p155 = pneg %p149
      %p156 = scmp.eq.s32.totalorder %s20, 7
      %p157 = por %p155, %p156
      %p158 = scmp.ne.s32.totalorder %s150, %s153
      %p159 = scmp.eq.s32.totalorder %s20, 0
      %p160 = por %p158, %p159
      %p161 = scmp.ne.s32.totalorder %s150, %s153
      %p162 = scmp.eq.s32.totalorder %s25, 7
      %p163 = por %p161, %p162
      %p164 = scmp.ne.s32.totalorder %s153, %s154
      %p165 = scmp.eq.s32.totalorder %s25, 0
      %p166 = por %p164, %p165
      %p167 = scmp.ne.s32.totalorder %s153, %s154
      %p168 = scmp.eq.s32.totalorder %s26, 7
      %p169 = por %p167, %p168
      %p171 = scmp.ne.s32.totalorder %s154, %s170
      %p172 = scmp.eq.s32.totalorder %s26, 0
      %p173 = por %p171, %p172
      %s174 = ssub.s32 %s27, %s46
      %s175 = ssub.s32 %s29, %s38
      %s176 = sor.u32 %s174, %s175
      %s177 = ssub.s32 %s28, %s42
      %s178 = sor.u32 %s176, %s177
      %p179 = scmp.eq.s32.totalorder %s178, 0
      %s181 = sadd.s32 %s180, 1
      %s182 = scalar_select %p179, %s180, %s181
      %p185 = pneg %p179
      %p186 = scmp.eq.s32.totalorder %s20, 7
      %p187 = por %p185, %p186
      %p188 = scmp.ne.s32.totalorder %s180, %s183
      %p189 = scmp.eq.s32.totalorder %s20, 0
      %p190 = por %p188, %p189
      %p191 = scmp.ne.s32.totalorder %s180, %s183
      %p192 = scmp.eq.s32.totalorder %s25, 7
      %p193 = por %p191, %p192
      %p194 = scmp.ne.s32.totalorder %s183, %s184
      %p195 = scmp.eq.s32.totalorder %s25, 0
      %p196 = por %p194, %p195
      %p197 = scmp.ne.s32.totalorder %s183, %s184
      %p198 = scmp.eq.s32.totalorder %s26, 7
      %p199 = por %p197, %p198
      %p201 = scmp.ne.s32.totalorder %s184, %s200
      %p202 = scmp.eq.s32.totalorder %s26, 0
      %p203 = por %p201, %p202
      %s204 = ssub.s32 %s27, %s46
      %s205 = ssub.s32 %s29, %s38
      %s206 = sor.u32 %s204, %s205
      %s207 = ssub.s32 %s28, %s42
      %s208 = sor.u32 %s206, %s207
      %p209 = scmp.eq.s32.totalorder %s208, 0
      %s211 = sadd.s32 %s210, 1
      %s212 = scalar_select %p209, %s210, %s211
      %p215 = pneg %p209
      %p216 = scmp.eq.s32.totalorder %s20, 7
      %p217 = por %p215, %p216
      %p218 = scmp.ne.s32.totalorder %s210, %s213
      %p219 = scmp.eq.s32.totalorder %s20, 0
      %p220 = por %p218, %p219
      %p221 = scmp.ne.s32.totalorder %s210, %s213
      %p222 = scmp.eq.s32.totalorder %s25, 7
      %p223 = por %p221, %p222
      %p224 = scmp.ne.s32.totalorder %s213, %s214
      %p225 = scmp.eq.s32.totalorder %s25, 0
      %p226 = por %p224, %p225
      %p227 = scmp.ne.s32.totalorder %s213, %s214
      %p228 = scmp.eq.s32.totalorder %s26, 7
      %p229 = por %p227, %p228
      %p231 = scmp.ne.s32.totalorder %s214, %s230
      %p232 = scmp.eq.s32.totalorder %s26, 0
      %p233 = por %p231, %p232
      %s234 = ssub.s32 %s27, %s46
      %s235 = ssub.s32 %s29, %s38
      %s236 = sor.u32 %s234, %s235
      %s237 = ssub.s32 %s28, %s42
      %s238 = sor.u32 %s236, %s237
      %p239 = scmp.eq.s32.totalorder %s238, 0
      %s241 = sadd.s32 %s240, 1
      %s242 = scalar_select %p239, %s240, %s241
      %p245 = pneg %p239
      %p246 = scmp.eq.s32.totalorder %s20, 7
      %p247 = por %p245, %p246
      %p248 = scmp.ne.s32.totalorder %s240, %s243
      %p249 = scmp.eq.s32.totalorder %s20, 0
      %p250 = por %p248, %p249
      %p251 = scmp.ne.s32.totalorder %s240, %s243
      %p252 = scmp.eq.s32.totalorder %s25, 7
      %p253 = por %p251, %p252
      %p254 = scmp.ne.s32.totalorder %s243, %s244
      %p255 = scmp.eq.s32.totalorder %s25, 0
      %p256 = por %p254, %p255
      %p257 = scmp.ne.s32.totalorder %s243, %s244
      %p258 = scmp.eq.s32.totalorder %s26, 7
      %p259 = por %p257, %p258
      %p261 = scmp.ne.s32.totalorder %s244, %s260
      %p262 = scmp.eq.s32.totalorder %s26, 0
      %p263 = por %p261, %p262
      %p264 = scmp.le.s32.totalorder 1, %s20
      %p265 = scmp.lt.s32.totalorder %s20, 9
      %p266 = pnand %p264, %p265
      %p267 = pneg %p266
      // Predicated region
      $region9: #{fused_norm_qkv_rope.1} parent=5 // pred_check
        _
      $region10: #{fused_norm_qkv_rope.1} parent=5 // pred_check_branch
        %269 = sbr.rel (%p266) target = $region12
      $region11: #{fused_norm_qkv_rope.1} parent=5 // pred_region
        %s270 = ssub.s32 %s20, 1
        // Predicated region
        $region13: #{fused_norm_qkv_rope.1} parent=11 // pred_check
          %p271 = pneg %p88
        $region14: #{fused_norm_qkv_rope.1} parent=11 // pred_check_branch
          %273 = sbr.rel (%p271) target = $region16
        $region15: #{fused_norm_qkv_rope.1} parent=11 // pred_region
          _
        $region16: #{fused_norm_qkv_rope.1} parent=11 // pred_fallthru
          _
        // Predicated region
        $region17: #{fused_norm_qkv_rope.1} parent=11 // pred_check
          %p274 = pneg %p140
        $region18: #{fused_norm_qkv_rope.1} parent=11 // pred_check_branch
          %276 = sbr.rel (%p274) target = $region20
        $region19: #{fused_norm_qkv_rope.1} parent=11 // pred_region
          %p277 = scmp.lt.s32.totalorder %s31, 0
          %s278 = scalar_select %p277, %s31, 0
          %s279 = smul.addr %s278, 8
          %s280 = scalar_lea.vmem %s3, %s279
        $region20: #{fused_norm_qkv_rope.1} parent=11 // pred_fallthru
          _
        // Predicated region
        $region21: #{fused_norm_qkv_rope.1} parent=11 // pred_check
          %p281 = pneg %p166
        $region22: #{fused_norm_qkv_rope.1} parent=11 // pred_check_branch
          %283 = sbr.rel (%p281) target = $region24
        $region23: #{fused_norm_qkv_rope.1} parent=11 // pred_region
          %p284 = scmp.lt.s32.totalorder %s31, 0
          %s285 = scalar_select %p284, %s31, 0
          %s286 = smul.addr %s285, 8
          %s287 = scalar_lea.vmem %s4, %s286
        $region24: #{fused_norm_qkv_rope.1} parent=11 // pred_fallthru
          _
      $region12: #{fused_norm_qkv_rope.1} parent=5 // pred_fallthru
        _
      %p288 = scmp.lt.s32.totalorder %s20, 8
      // Predicated region
      $region25: #{fused_norm_qkv_rope.1} parent=5 // pred_check
        %p289 = pneg %p288
      $region26: #{fused_norm_qkv_rope.1} parent=5 // pred_check_branch
        %291 = sbr.rel (%p289) target = $region28
      $region27: #{fused_norm_qkv_rope.1} parent=5 // pred_region
        // Predicated region
        $region29: #{fused_norm_qkv_rope.1} parent=27 // pred_check
          %p292 = pneg %p61
        $region30: #{fused_norm_qkv_rope.1} parent=27 // pred_check_branch
          %294 = sbr.rel (%p292) target = $region32
        $region31: #{fused_norm_qkv_rope.1} parent=27 // pred_region
          %p295 = scmp.lt.s32.totalorder %s27, 1
          %s296 = scalar_select %p295, %s27, 1
          %p297 = scmp.lt.s32.totalorder %s28, 0
          %s298 = scalar_select %p297, %s28, 0
          %s299 = sadd.s32 %s298, %s296
          %s300 = smul.addr %s299, 4
          %s301 = scalar_lea.vmem %s0, %s300
        $region32: #{fused_norm_qkv_rope.1} parent=27 // pred_fallthru
          _
        // Predicated region
        $region33: #{fused_norm_qkv_rope.1} parent=27 // pred_check
          %p302 = pneg %p108
        $region34: #{fused_norm_qkv_rope.1} parent=27 // pred_check_branch
          %304 = sbr.rel (%p302) target = $region36
        $region35: #{fused_norm_qkv_rope.1} parent=27 // pred_region
          %p305 = scmp.lt.s32.totalorder %s29, 3
          %s306 = scalar_select %p305, %s29, 3
          %s307 = smul.addr %s306, 4
          %s308 = smul.addr %s307, 4
          %s309 = scalar_lea.vmem %s2, %s308
        $region36: #{fused_norm_qkv_rope.1} parent=27 // pred_fallthru
          _
      $region28: #{fused_norm_qkv_rope.1} parent=5 // pred_fallthru
        _
      %p310 = scmp.le.s32.totalorder 1, %s20
      %p311 = scmp.lt.s32.totalorder %s20, 9
      %p312 = pnand %p310, %p311
      %p313 = pneg %p312
      // Predicated region
      $region37: #{fused_norm_qkv_rope.1} parent=5 // pred_check
        _
      $region38: #{fused_norm_qkv_rope.1} parent=5 // pred_check_branch
        %315 = sbr.rel (%p312) target = $region40
      $region39: #{fused_norm_qkv_rope.1} parent=5 // pred_region
        %s316 = ssub.s32 %s20, 1
        %p317 = scmp.lt.s32.totalorder %s30, 1
        %s318 = scalar_select %p317, %s30, 1
        %p319 = scmp.lt.s32.totalorder %s31, 0
        %s320 = scalar_select %p319, %s31, 0
        %s321 = sadd.s32 %s320, %s318
        %s322 = smul.addr %s321, 4
        %s323 = scalar_lea.vmem %s0, %s322
        %p324 = pneg %p67
        %p325 = pneg %p64
        %p326 = pneg %p88
        %p327 = pneg %p85
        %p328 = scmp.lt.s32.totalorder %s32, 3
        %s329 = scalar_select %p328, %s32, 3
        %s330 = smul.addr %s329, 4
        %s331 = smul.addr %s330, 4
        %s332 = scalar_lea.vmem %s2, %s331
        %p333 = pneg %p114
        %p334 = pneg %p111
        %p335 = scmp.lt.s32.totalorder %s31, 0
        %s336 = scalar_select %p335, %s31, 0
        %s337 = smul.addr %s336, 8
        %s338 = scalar_lea.vmem %s3, %s337
        %p339 = pneg %p140
        %p340 = pneg %p137
        %p341 = scmp.lt.s32.totalorder %s31, 0
        %s342 = scalar_select %p341, %s31, 0
        %s343 = smul.addr %s342, 8
        %s344 = scalar_lea.vmem %s4, %s343
        %p345 = pneg %p166
        %p346 = pneg %p163
        %p347 = pneg %p196
        %p348 = pneg %p193
        %s349 = sand.u32 %s183, 1
        %s350 = scalar_lea.sflag [#allocation4], %s349
        %s351 = sand.u32 %s183, 1
        %s352 = smul.addr %s351, 4
        %s353 = scalar_lea.vmem [#allocation3], %s352
        %p354 = pneg %p226
        %p355 = pneg %p223
        %s356 = sand.u32 %s25, 1
        %s357 = scalar_lea.sflag [#allocation6], %s356
        %s358 = sand.u32 %s213, 1
        %s359 = smul.addr %s358, 4
        %s360 = scalar_lea.vmem [#allocation5], %s359
        %p361 = pneg %p256
        %p362 = pneg %p253
        %s363 = sand.u32 %s25, 1
        %s364 = scalar_lea.sflag [#allocation6], %s363
        %s365 = sand.u32 %s243, 1
        %s366 = smul.addr %s365, 4
        %s367 = scalar_lea.vmem [#allocation7], %s366
        %p368 = scmp.lt.s32.totalorder %s30, 1
        %s369 = scalar_select %p368, %s30, 1
        %p370 = scmp.lt.s32.totalorder %s31, 0
        %s371 = scalar_select %p370, %s31, 0
        %s372 = sadd.s32 %s371, %s369
        %s373 = smul.addr %s372, 4
        %s374 = scalar_lea.vmem %s0, %s373
        %p375 = scmp.lt.s32.totalorder %s32, 3
        %s376 = scalar_select %p375, %s32, 3
        %s377 = smul.addr %s376, 4
        %s378 = smul.addr %s377, 4
        %s379 = scalar_lea.vmem %s2, %s378
        %p380 = scmp.lt.s32.totalorder %s31, 0
        %s381 = scalar_select %p380, %s31, 0
        %s382 = smul.addr %s381, 8
        %s383 = scalar_lea.vmem %s3, %s382
        %p384 = scmp.lt.s32.totalorder %s31, 0
        %s385 = scalar_select %p384, %s31, 0
        %s386 = smul.addr %s385, 8
        %s387 = scalar_lea.vmem %s4, %s386
        %p389 = scmp.eq.s32.totalorder %s32, 0
        // Predicated region
        $region41: #{fused_norm_qkv_rope.1} parent=39 // pred_check
          %p390 = pneg %p389
        $region42: #{fused_norm_qkv_rope.1} parent=39 // pred_check_branch
          %392 = sbr.rel (%p390) target = $region44
        $region43: #{fused_norm_qkv_rope.1} parent=39 // pred_region
          %v393 = vld [vmem:[%s374] sm:$0xf]
          %v394 = vunpack.c.l.bf16 %v393
          %v395 = vmul.f32 %v394, %v394
          %vm396 = vcmask 261120
          %v397 = vsel %vm396, %v395, 0.0
          %398 = vadd.xlane.f32.xlu0 %v397
          %v399 = vpop.xlane.xlu0 %398
          %v400 = vrcp.pop 32.0
          %v401 = vmul.f32 32.0, %v400
          %v402 = vsub.f32 1.0, %v401
          %v403 = vmul.f32 %v400, %v402
          %v404 = vadd.f32 %v400, %v403
          %vm405 = vweird.f32 %v400
          %v406 = vsel %vm405, %v400, %v404
          %v407 = vmul.f32 %v399, %v406
          %v408 = vadd.f32 %v407, 1e-06
          %v409 = vrsqrt.pop %v408
          %v410 = vmul.f32 %v409, %v408
          %v411 = vmul.f32 %v410, %v409
          %v412 = vmul.f32 0.5, %v411
          %v413 = vsub.f32 1.5, %v412
          %v414 = vmul.f32 %v409, %v413
          %vm415 = vweird.f32 %v408
          %vm416 = vweird.f32 %v409
          %vm417 = vmor %vm415, %vm416
          %v418 = vsel %vm417, %v409, %v414
          %v419 = vmul.f32 %v394, %v418
          %v420 = vld [vmem:[%s1] sm:$0x1]
          %v422 = vperm.slane %v420, 0
          %v424 = vmul.f32 %v419, %v422
          %v425 = vpack.c.bf16 %v424, %v424
          %vm426 = vcmask 257024
          %427 = vst.msk [vmem:[#allocation2] sm:$0xf] %vm426, %v425
        $region44: #{fused_norm_qkv_rope.1} parent=39 // pred_fallthru
          _
        %v428 = vld [vmem:[#allocation2] sm:$0xf]
        %v429 = vld [vmem:[%s379] sm:$0xf]
        %v430 = vld [vmem:[%s379 + $0x4] sm:$0xf]
        %v431 = vld [vmem:[%s379 + $0x8] sm:$0xf]
        %v432 = vld [vmem:[%s379 + $0xc] sm:$0xf]
        %v437 = vunpack.c.l.b16 %v429
        %v438 = vunpack.c.l.b16 %v430
        %v439 = vunpack.c.l.b16 %v431
        %v440 = vunpack.c.l.b16 %v432
        %v441 = vpack.c.b16 %v438, %v437
        %v442 = vpack.c.b16 %v440, %v439
        %vm445 = vcmask 261120
        %v447 = vsel %vm445, %v428, 0
        %449 = vmatpush.bf16.msra.mxu0 0
        %450 = vmatpush.bf16.msra.mxu0 0
        %451 = vmatpush.bf16.msra.mxu0 0
        %452 = vmatpush.bf16.msra.mxu0 0
        %453 = vmatpush.bf16.msra.mxu0 0
        %454 = vmatpush.bf16.msra.mxu0 0
        %455 = vmatpush.bf16.msra.mxu0 %v442
        %456 = vmatpush.bf16.msra.mxu0 %v441
        %457 = vmatmul.bf16.gmra.mxu0 %v447
        %v458 = vpop.f32.mrf.mxu0
        %v459 = vadd.f32 0.0, %v458
        %v460 = vpop.f32.mrf.mxu0
        %461 = vdwg.mxu0
        %v462 = vld [vmem:[%s383] sm:$0xff]
        %v463 = vld [vmem:[%s387] sm:$0xff]
        %v464 = vsub.f32 0.0, %v459
        %466 = vrot.lane.b32.xlu0 %v464, 124
        %v467 = vpop.permute.xlu0 %466
        %470 = vrot.lane.b32.xlu0 %v459, 4
        %v471 = vpop.permute.xlu0 %470
        %vm473 = vcmask 31744
        %v474 = vsel %vm473, %v467, %v471
        %v475 = vmul.f32 %v459, %v462
        %v476 = vmul.f32 %v474, %v463
        %v477 = vadd.f32 %v475, %v476
        %v478 = vpack.c.bf16 %v477, %v477
        %vm479 = vcmask 60416
        %480 = vst.msk [vmem:[%s353] sm:$0xf] %vm479, %v478
        %481 = vrot.lane.b32.xlu0 %v464, 116
        %v482 = vpop.permute.xlu0 %481
        %484 = vrot.lane.b32.xlu0 %v459, 124
        %v485 = vpop.permute.xlu0 %484
        %v487 = vsel %vm473, %v482, %v485
        %489 = vrot.lane.b32.xlu0 %v462, 8
        %v490 = vpop.permute.xlu0 %489
        %v492 = vmul.f32 %v459, %v490
        %v493 = vmul.f32 %v487, %v463
        %495 = vrot.lane.b32.xlu0 %v493, 8
        %v496 = vpop.permute.xlu0 %495
        %v498 = vadd.f32 %v492, %v496
        %v499 = vpack.c.bf16 %v498, %v498
        %501 = vrot.lane.b32.xlu0 %v499, 120
        %v502 = vpop.permute.xlu0 %501
        %504 = vst.msk [vmem:[%s360] sm:$0xf] %vm479, %v502
        %v505 = vpack.c.bf16 %v459, %v459
        %507 = vrot.lane.b32.xlu0 %v505, 112
        %v508 = vpop.permute.xlu0 %507
        %510 = vst.msk [vmem:[%s367] sm:$0xf] %vm479, %v508
        %s511 = sand.u32 %s183, 1
        %s512 = scalar_lea.sflag [#allocation4], %s511
        %s513 = sand.u32 %s183, 1
        %s514 = smul.addr %s513, 4
        %s515 = scalar_lea.vmem [#allocation3], %s514
        %s516 = sand.u32 %s25, 1
        %s517 = scalar_lea.sflag [#allocation6], %s516
        %s518 = sand.u32 %s213, 1
        %s519 = smul.addr %s518, 4
        %s520 = scalar_lea.vmem [#allocation5], %s519
        %s521 = sand.u32 %s25, 1
        %s522 = scalar_lea.sflag [#allocation6], %s521
        %s523 = sand.u32 %s243, 1
        %s524 = smul.addr %s523, 4
        %s525 = scalar_lea.vmem [#allocation7], %s524
        // Predicated region
        $region45: #{fused_norm_qkv_rope.1} parent=39 // pred_check
          %p526 = pneg %p193
        $region46: #{fused_norm_qkv_rope.1} parent=39 // pred_check_branch
          %528 = sbr.rel (%p526) target = $region48
        $region47: #{fused_norm_qkv_rope.1} parent=39 // pred_region
          %530 = vsyncadd %s512, 0
          %s531 = sadd.s32 %s31, %s32
          %s532 = smul.addr %s30, 4
          %s533 = sadd.s32 %s531, %s532
          %s534 = smul.addr %s533, 4
          %s535 = scalar_lea.hbm %s5, %s534
          %s537 = sshll.u32 %s515, 4
          %s538 = int_to_ptr.vmem [resolvable:$true] %s537
          %s539 = sshll.u32 %s535, 4
          %s540 = int_to_ptr.hbm [resolvable:$true] %s539
          %542 = dma.vmem_to_hbm [thread:$0]  %s538, 64, %s540, %s512
        $region48: #{fused_norm_qkv_rope.1} parent=39 // pred_fallthru
          _
        // Predicated region
        $region49: #{fused_norm_qkv_rope.1} parent=39 // pred_check
          %p543 = pneg %p223
        $region50: #{fused_norm_qkv_rope.1} parent=39 // pred_check_branch
          %545 = sbr.rel (%p543) target = $region52
        $region51: #{fused_norm_qkv_rope.1} parent=39 // pred_region
          %547 = vsyncadd %s517, 0
          %s548 = sadd.s32 %s31, %s32
          %s549 = smul.addr %s30, 4
          %s550 = sadd.s32 %s548, %s549
          %s551 = smul.addr %s550, 4
          %s552 = scalar_lea.hbm %s6, %s551
          %s554 = sshll.u32 %s520, 4
          %s555 = int_to_ptr.vmem [resolvable:$true] %s554
          %s556 = sshll.u32 %s552, 4
          %s557 = int_to_ptr.hbm [resolvable:$true] %s556
          %559 = dma.vmem_to_hbm [thread:$0]  %s555, 64, %s557, %s517
        $region52: #{fused_norm_qkv_rope.1} parent=39 // pred_fallthru
          _
        // Predicated region
        $region53: #{fused_norm_qkv_rope.1} parent=39 // pred_check
          %p560 = pneg %p253
        $region54: #{fused_norm_qkv_rope.1} parent=39 // pred_check_branch
          %562 = sbr.rel (%p560) target = $region56
        $region55: #{fused_norm_qkv_rope.1} parent=39 // pred_region
          %564 = vsyncadd %s522, 0
          %s565 = sadd.s32 %s31, %s32
          %s566 = smul.addr %s30, 4
          %s567 = sadd.s32 %s565, %s566
          %s568 = smul.addr %s567, 4
          %s569 = scalar_lea.hbm %s7, %s568
          %s571 = sshll.u32 %s525, 4
          %s572 = int_to_ptr.vmem [resolvable:$true] %s571
          %s573 = sshll.u32 %s569, 4
          %s574 = int_to_ptr.hbm [resolvable:$true] %s573
          %576 = dma.vmem_to_hbm [thread:$0]  %s572, 64, %s574, %s522
        $region56: #{fused_norm_qkv_rope.1} parent=39 // pred_fallthru
          _
      $region40: #{fused_norm_qkv_rope.1} parent=5 // pred_fallthru
        _
      %p577 = scmp.le.s32.totalorder 2, %s20
      // Predicated region
      $region57: #{fused_norm_qkv_rope.1} parent=5 // pred_check
        %p578 = pneg %p577
      $region58: #{fused_norm_qkv_rope.1} parent=5 // pred_check_branch
        %580 = sbr.rel (%p578) target = $region60
      $region59: #{fused_norm_qkv_rope.1} parent=5 // pred_region
        %s581 = ssub.s32 %s20, 2
        // Predicated region
        $region61: #{fused_norm_qkv_rope.1} parent=59 // pred_check
          %p582 = pneg %p199
        $region62: #{fused_norm_qkv_rope.1} parent=59 // pred_check_branch
          %584 = sbr.rel (%p582) target = $region64
        $region63: #{fused_norm_qkv_rope.1} parent=59 // pred_region
          %s585 = sand.u32 %s184, 1
          %s586 = scalar_lea.sflag [#allocation4], %s585
          %s587 = sand.u32 %s184, 1
          %s588 = smul.addr %s587, 4
          %s589 = scalar_lea.vmem [#allocation3], %s588
          %591 = dma.done %s586, 64
        $region64: #{fused_norm_qkv_rope.1} parent=59 // pred_fallthru
          _
        // Predicated region
        $region65: #{fused_norm_qkv_rope.1} parent=59 // pred_check
          %p592 = pneg %p229
        $region66: #{fused_norm_qkv_rope.1} parent=59 // pred_check_branch
          %594 = sbr.rel (%p592) target = $region68
        $region67: #{fused_norm_qkv_rope.1} parent=59 // pred_region
          %s595 = sand.u32 %s26, 1
          %s596 = scalar_lea.sflag [#allocation6], %s595
          %s597 = sand.u32 %s214, 1
          %s598 = smul.addr %s597, 4
          %s599 = scalar_lea.vmem [#allocation5], %s598
          %601 = dma.done %s596, 64
        $region68: #{fused_norm_qkv_rope.1} parent=59 // pred_fallthru
          _
        // Predicated region
        $region69: #{fused_norm_qkv_rope.1} parent=59 // pred_check
          %p602 = pneg %p259
        $region70: #{fused_norm_qkv_rope.1} parent=59 // pred_check_branch
          %604 = sbr.rel (%p602) target = $region72
        $region71: #{fused_norm_qkv_rope.1} parent=59 // pred_region
          %s605 = sand.u32 %s26, 1
          %s606 = scalar_lea.sflag [#allocation6], %s605
          %s607 = sand.u32 %s244, 1
          %s608 = smul.addr %s607, 4
          %s609 = scalar_lea.vmem [#allocation7], %s608
          %611 = dma.done %s606, 64
        $region72: #{fused_norm_qkv_rope.1} parent=59 // pred_fallthru
          _
      $region60: #{fused_norm_qkv_rope.1} parent=5 // pred_fallthru
        _
    $region6: #{fused_norm_qkv_rope.1} parent=1 // loop_footer
      %s24 = sadd.s32 1, %s20
    $region7: #{fused_norm_qkv_rope.1} parent=1 // loop_footer_branch
      %19 = sbr.rel target = $region3
    $region8: #{fused_norm_qkv_rope.1} parent=1 // loop_exit
      _
    %612 = vsyncpa [#allocation4], 1
    %s613 = scalar_lea.sflag [#allocation4], 1
    %614 = vsyncpa %s613, 1
    %615 = vsyncpa [#allocation6], 1
    %s616 = scalar_lea.sflag [#allocation6], 1
    %617 = vsyncpa %s616, 1

</llo_original>
